<compile_context>
chip_gen: v7x
topology: tpu7x:2x2x1
jax: 0.10.0
libtpu: 0.0.40
codegen_flags: <defaults>
</compile_context>

<pallas_src>
import functools

import jax
import jax.numpy as jnp
from jax.experimental import pallas as pl
from jax.experimental.pallas import tpu as pltpu


POOLING_SIZE = 3          # resnet_config.POOLING_SIZE (group_size == pooled size)
SPATIAL_SCALE = 1.0       # rfcn_config.SCALE
N_CLASSES = 2
ROI_BLOCK = 16            # ROIs processed per grid step in the PS-RoI kernel
C_PAD = 128               # lane-dense padded channel count of the PS score slab
HEAD_PAD = 128            # lane-dense padded width of the fused head output


def _round_up(x, m):
    return ((x + m - 1) // m) * m


def _plan_row_tiling(hw):
    """Pad H*W to a multiple of 256; pick a 128-512 row tile with grid >= 2."""
    hw_pad = _round_up(hw, 256)
    for tm in (512, 256, 128):
        if hw_pad % tm == 0 and hw_pad // tm >= 2:
            return hw_pad, tm
    return hw_pad, hw_pad


# -----------------------------------------------------------------------------
# Kernel A: fused channels-last 1x1-conv chain (base -> conv_new -> cls|bbox)
# -----------------------------------------------------------------------------
def _conv_chain_kernel(x_ref, w1_ref, b1_ref, w2_ref, b2_ref, w3_ref, b3_ref,
                       o_ref):
    # x already bf16 (cast in the wrapper -> half the streamed DMA bytes);
    # MXU accumulates in f32, bias/ReLU stay f32, store is bf16 (lane-dense).
    h = jnp.dot(x_ref[...], w1_ref[...], preferred_element_type=jnp.float32)
    h = jnp.maximum(h + b1_ref[...], 0.0)
    h = jnp.dot(h.astype(jnp.bfloat16), w2_ref[...],
                preferred_element_type=jnp.float32)
    h = jnp.maximum(h + b2_ref[...], 0.0)
    s = jnp.dot(h.astype(jnp.bfloat16), w3_ref[...],
                preferred_element_type=jnp.float32)
    o_ref[...] = (s + b3_ref[...]).astype(o_ref.dtype)


def conv_chain(x_hw_c_bf16, w1, b1, w2, b2, w3, b3, tm):
    """x: (hw_pad, Cin) bf16 channels-last.  Returns (hw_pad, C_PAD) bf16 slab."""
    hw_pad, cin = x_hw_c_bf16.shape
    cmid = w1.shape[1]
    cout = w3.shape[1]
    return pl.pallas_call(
        _conv_chain_kernel,
        grid=(hw_pad // tm,),
        out_shape=jax.ShapeDtypeStruct((hw_pad, cout), jnp.bfloat16),
        in_specs=[
            pl.BlockSpec((tm, cin), lambda i: (i, 0)),
            pl.BlockSpec((cin, cmid), lambda i: (0, 0)),
            pl.BlockSpec((1, cmid), lambda i: (0, 0)),
            pl.BlockSpec((cmid, cmid), lambda i: (0, 0)),
            pl.BlockSpec((1, cmid), lambda i: (0, 0)),
            pl.BlockSpec((cmid, cout), lambda i: (0, 0)),
            pl.BlockSpec((1, cout), lambda i: (0, 0)),
        ],
        out_specs=pl.BlockSpec((tm, cout), lambda i: (i, 0)),
        compiler_params=pltpu.CompilerParams(
            dimension_semantics=("parallel",),
            vmem_limit_bytes=48 * 1024 * 1024),
    )(x_hw_c_bf16,
      w1.astype(jnp.bfloat16), b1.reshape(1, -1).astype(jnp.float32),
      w2.astype(jnp.bfloat16), b2.reshape(1, -1).astype(jnp.float32),
      w3.astype(jnp.bfloat16), b3.reshape(1, -1).astype(jnp.float32))


# -----------------------------------------------------------------------------
# Kernel B: PS-RoI pooling (bf16 mask matmul) + fused ps_average_pool + softmax
# -----------------------------------------------------------------------------
def _psroi_heads_kernel(prow_ref, pcol_ref, bounds_ref, score_ref, sel_ref,
                        whead_ref, out_ref, *, roi_block, group, n_classes):
    gg = group * group
    prow = prow_ref[...]                                    # (1, HW)
    pcol = pcol_ref[...]
    bnd = bounds_ref[...]                                   # (gg*RB, 8) f32
    hs = bnd[:, 0:1]
    he = bnd[:, 1:2]
    ws = bnd[:, 2:3]
    we = bnd[:, 3:4]
    inva = bnd[:, 4:5]
    # (gg*RB, HW) 0/1 bin-membership masks in bf16 (2x MXU throughput).
    inside = ((prow >= hs) & (prow < he) & (pcol >= ws) & (pcol < we))
    masks = inside.astype(jnp.bfloat16)
    # Position-sensitive bin sums on the MXU: (gg*RB, HW) @ (HW, C_PAD) -> f32.
    bin_sums = jnp.dot(masks, score_ref[...],
                       preferred_element_type=jnp.float32)
    # Per-bin 1/area scale applied post-matmul (exact; constant per mask row,
    # and only C_PAD lanes wide instead of HW wide).
    bin_sums = bin_sums * inva
    # Select the matching bin per channel (channel c uses bin c % gg).
    # Rows are bin-major (row = b*roi_block + n), so slices are 8-row aligned.
    sel = sel_ref[...]                                      # (gg, C_PAD)
    pooled = bin_sums[0:roi_block, :] * sel[0:1, :]
    for b in range(1, gg):
        pooled = pooled + (bin_sums[b * roi_block:(b + 1) * roi_block, :] *
                           sel[b:b + 1, :])
    # Fused "ps_average_pool" 3x3 valid convs: single MXU matmul into one
    # lane-dense (RB, HEAD_PAD) slab (cls in lanes [0, n_classes),
    # bbox in lanes [n_classes, n_classes+4), rest zero).
    raw = jnp.dot(pooled.astype(jnp.bfloat16), whead_ref[...],
                  preferred_element_type=jnp.float32)       # (RB, HEAD_PAD)
    # Fused class softmax restricted to the class lanes (reciprocal on EUP).
    lane = jax.lax.broadcasted_iota(jnp.int32, raw.shape, 1)
    cls_mask = lane < n_classes
    m = jnp.max(jnp.where(cls_mask, raw, -jnp.inf), axis=1, keepdims=True)
    e = jnp.exp(jnp.where(cls_mask, raw - m, -jnp.inf))     # 0 off class lanes
    denom = jnp.sum(e, axis=1, keepdims=True)
    probs = e * pl.reciprocal(denom, approx=True)
    out_ref[...] = jnp.where(cls_mask, probs, raw).astype(out_ref.dtype)


def _psroi_bin_bounds(rois5, h, w, group, spatial_scale):
    """Per-ROI integer bin boundaries (as f32) — scalar glue, plain JAX."""
    start_w = jnp.round(rois5[:, 1]) * spatial_scale
    start_h = jnp.round(rois5[:, 2]) * spatial_scale
    end_w = (jnp.round(rois5[:, 3]) + 1.0) * spatial_scale
    end_h = (jnp.round(rois5[:, 4]) + 1.0) * spatial_scale
    roi_h = jnp.maximum(end_h - start_h, 0.1)
    roi_w = jnp.maximum(end_w - start_w, 0.1)
    bin_h = roi_h / group
    bin_w = roi_w / group
    g = jnp.arange(group, dtype=jnp.float32)
    hstart = jnp.floor(g[None, :] * bin_h[:, None] + start_h[:, None])
    hend = jnp.ceil((g[None, :] + 1.0) * bin_h[:, None] + start_h[:, None])
    wstart = jnp.floor(g[None, :] * bin_w[:, None] + start_w[:, None])
    wend = jnp.ceil((g[None, :] + 1.0) * bin_w[:, None] + start_w[:, None])
    hstart = jnp.clip(hstart, 0.0, float(h))
    hend = jnp.clip(hend, 0.0, float(h))
    wstart = jnp.clip(wstart, 0.0, float(w))
    wend = jnp.clip(wend, 0.0, float(w))
    return hstart, hend, wstart, wend       # each (N, G) float32


def _pack_bounds(hstart, hend, wstart, wend, group, roi_block):
    """(N, G) bounds -> one (num_blocks*G*G*roi_block, 8) f32 array.

    Columns: [hs, he, ws, we, 1/area, 0, 0, 0]; rows block-major then
    bin-major then roi-within-block (one DMA per grid step).
    """
    n = hstart.shape[0]
    gg = group * group
    ph = jnp.arange(gg) // group
    pw = jnp.arange(gg) % group
    hs = hstart[:, ph].T                    # (GG, N)
    he = hend[:, ph].T
    ws = wstart[:, pw].T
    we = wend[:, pw].T
    inva = 1.0 / jnp.maximum((he - hs) * (we - ws), 1.0)  # empty bin -> mask 0
    num_blocks = n // roi_block

    def reorder(a):
        return (a.reshape(gg, num_blocks, roi_block)
                 .transpose(1, 0, 2)
                 .reshape(num_blocks * gg * roi_block, 1)
                 .astype(jnp.float32))

    cols = [reorder(a) for a in (hs, he, ws, we, inva)]
    zeros = jnp.zeros_like(cols[0])
    packed = jnp.concatenate(cols + [zeros, zeros, zeros], axis=1)  # (.., 8)
    return packed, num_blocks


def psroi_heads(score_slab, rois5, sel, whead, h, w, hw_pad, group,
                spatial_scale, n_classes):
    """PS-RoI pooling + fused head convs + softmax.  Returns (cls_prob, bbox)."""
    hw = h * w
    gg = group * group
    n = rois5.shape[0]
    roi_block = ROI_BLOCK
    n_pad = _round_up(n, roi_block)
    if n_pad != n:
        rois5 = jnp.concatenate(
            [rois5, jnp.zeros((n_pad - n, 5), rois5.dtype)], axis=0)

    hstart, hend, wstart, wend = _psroi_bin_bounds(
        rois5, h, w, group, spatial_scale)
    bounds, num_blocks = _pack_bounds(
        hstart, hend, wstart, wend, group, roi_block)

    # Pixel row/col maps; padded (>= hw) positions get a sentinel that never
    # lands inside any bin, so slab padding rows contribute nothing.
    idx = jnp.arange(hw_pad)
    prow = jnp.where(idx < hw, (idx // w).astype(jnp.float32),
                     -1e9).reshape(1, hw_pad)
    pcol = jnp.where(idx < hw, (idx % w).astype(jnp.float32),
                     -1e9).reshape(1, hw_pad)

    out = pl.pallas_call(
        functools.partial(_psroi_heads_kernel,
                          roi_block=roi_block, group=group,
                          n_classes=n_classes),
        grid=(num_blocks,),
        out_shape=jax.ShapeDtypeStruct((n_pad, HEAD_PAD), jnp.float32),
        in_specs=[
            pl.BlockSpec((1, hw_pad), lambda i: (0, 0)),
            pl.BlockSpec((1, hw_pad), lambda i: (0, 0)),
            pl.BlockSpec((gg * roi_block, 8), lambda i: (i, 0)),
            pl.BlockSpec((hw_pad, C_PAD), lambda i: (0, 0)),
            pl.BlockSpec((gg, C_PAD), lambda i: (0, 0)),
            pl.BlockSpec((C_PAD, HEAD_PAD), lambda i: (0, 0)),
        ],
        out_specs=pl.BlockSpec((roi_block, HEAD_PAD), lambda i: (i, 0)),
        compiler_params=pltpu.CompilerParams(
            dimension_semantics=("parallel",),
            vmem_limit_bytes=32 * 1024 * 1024),
    )(prow, pcol, bounds, score_slab, sel, whead)
    cls_prob = out[:n, :n_classes]
    bbox_pred = out[:n, n_classes:n_classes + 4]
    return cls_prob, bbox_pred


# -----------------------------------------------------------------------------
# Module-level helper (plain jnp: a (1, N) Pallas call would be pure launch
# overhead; XLA fuses this for free).  Matches the PyTorch helper exactly.
# -----------------------------------------------------------------------------
def cross_entropy(predictions, targets, epsilon=1e-12):
    predictions = jnp.clip(predictions, epsilon, 1.0 - epsilon)
    n = predictions.shape[0]
    return -(targets * jnp.log(predictions + 1e-9) / n)


# -----------------------------------------------------------------------------
# R-FCN forward (inference path)
# -----------------------------------------------------------------------------
def init_params(key, cin=4, cmid=8):
    g = POOLING_SIZE
    ks = jax.random.split(key, 6)
    std = 0.01  # matches normal_init(m, 0, 0.01); biases zero
    return {
        "base_w": std * jax.random.normal(ks[0], (cin, cmid), jnp.float32),
        "base_b": jnp.zeros((cmid,), jnp.float32),
        "conv_new_w": std * jax.random.normal(ks[1], (cmid, cmid), jnp.float32),
        "conv_new_b": jnp.zeros((cmid,), jnp.float32),
        "cls_base_w": std * jax.random.normal(
            ks[2], (cmid, N_CLASSES * g * g), jnp.float32),
        "cls_base_b": jnp.zeros((N_CLASSES * g * g,), jnp.float32),
        "bbox_base_w": std * jax.random.normal(
            ks[3], (cmid, 4 * g * g), jnp.float32),
        "bbox_base_b": jnp.zeros((4 * g * g,), jnp.float32),
        "avg_cls_w": std * jax.random.normal(
            ks[4], (N_CLASSES, N_CLASSES, 3, 3), jnp.float32),
        "avg_bbox_w": std * jax.random.normal(ks[5], (4, 4, 3, 3), jnp.float32),
    }


def rfcn_forward(params, image, image_metadata, gt_boxes, rois):
    """Inference-mode forward of _RFCN.  `rois` stands in for the RPN output."""
    del image_metadata  # only consumed by the (untranslated) RPN
    g = POOLING_SIZE
    gg = g * g
    c_cls = N_CLASSES * gg
    c_bbox = 4 * gg
    c_total = c_cls + c_bbox

    sizes = image[0].shape
    reshaped_image = image[0].reshape(1, sizes[0], sizes[1], sizes[2])
    cin, h, w = sizes
    hw = h * w
    hw_pad, tm = _plan_row_tiling(hw)

    # NCHW -> channels-last (H*W, Cin) once, cast to bf16 for the MXU chain.
    # TODO(synk): a real channels-last backbone output would remove this
    # transpose (full feature-map HBM round trip in XLA).
    x_hw_c = (jnp.transpose(reshaped_image[0], (1, 2, 0))
              .reshape(hw, cin).astype(jnp.bfloat16))
    if hw_pad != hw:
        x_hw_c = jnp.pad(x_hw_c, ((0, hw_pad - hw), (0, 0)))

    # TODO(synk): RCNN_base is a pretrained backbone defined outside this
    # module; a 1x1-conv + ReLU stand-in (stride 1, resize_scale == 1, so
    # scale_boxes_batch is identity) is fused into the conv chain below.
    del gt_boxes

    # Fused cls/bbox head weights, zero-padded to a lane-dense C_PAD output.
    cmid = params["conv_new_w"].shape[1]
    heads_w = jnp.zeros((cmid, C_PAD), jnp.float32)
    heads_w = heads_w.at[:, :c_cls].set(params["cls_base_w"])
    heads_w = heads_w.at[:, c_cls:c_total].set(params["bbox_base_w"])
    heads_b = jnp.zeros((C_PAD,), jnp.float32)
    heads_b = heads_b.at[:c_cls].set(params["cls_base_b"])
    heads_b = heads_b.at[c_cls:c_total].set(params["bbox_base_b"])

    score_slab = conv_chain(
        x_hw_c,
        params["base_w"], params["base_b"],
        params["conv_new_w"], params["conv_new_b"],
        heads_w, heads_b, tm)                               # (hw_pad, C_PAD) bf16

    # TODO(synk): RCNN_rpn (anchor gen + NMS) and _ProposalTargetLayer / OHEM
    # loss (training only) have no clean Pallas equivalent; ROIs come from the
    # caller and the eval path is taken.
    rpn_loss_cls = 0.0
    rpn_loss_bbox = 0.0
    rois_label = None

    # flattened ROI transform: (x, y, w, h) -> (batch_idx, x1, y1, x2, y2)
    fr = rois.reshape(-1, 4)
    zeros_batch = jnp.zeros_like(fr)
    fr5 = jnp.concatenate([zeros_batch[:, :1], fr], axis=1)
    fr5 = fr5.at[:, 3].add(fr5[:, 1] - 1.0)
    fr5 = fr5.at[:, 4].add(fr5[:, 2] - 1.0)

    # "ps_average_pool" 3x3 valid convs fused into ONE (C_PAD, HEAD_PAD) matmul
    # weight: cls -> lanes [0, N_CLASSES), bbox -> lanes [N_CLASSES, N_CLASSES+4).
    whead = jnp.zeros((C_PAD, HEAD_PAD), jnp.float32)
    whead = whead.at[:c_cls, :N_CLASSES].set(
        params["avg_cls_w"].reshape(N_CLASSES, c_cls).T)
    whead = whead.at[c_cls:c_total, N_CLASSES:N_CLASSES + 4].set(
        params["avg_bbox_w"].reshape(4, c_bbox).T)
    whead = whead.astype(jnp.bfloat16)

    # static one-hot bin selector: score channel c belongs to bin (c % G*G)
    c_idx = jnp.arange(C_PAD)
    sel = (((c_idx[None, :] % gg) == jnp.arange(gg)[:, None]) &
           (c_idx[None, :] < c_total)).astype(jnp.float32)

    cls_prob, bbox_pred = psroi_heads(
        score_slab, fr5, sel, whead, h, w, hw_pad, g,
        SPATIAL_SCALE, N_CLASSES)

    num_rois = rois.shape[1]
    cls_prob = cls_prob.reshape(1, num_rois, -1)
    bbox_pred = bbox_pred.reshape(1, num_rois, -1)

    return (rois, cls_prob, bbox_pred, rpn_loss_cls, rpn_loss_bbox,
            0.0, 0.0, rois_label)


# -----------------------------------------------------------------------------
if __name__ == "__main__":
    key = jax.random.PRNGKey(0)
    k_img, k_roi_xy, k_roi_wh, k_gt, k_par, k_tgt = jax.random.split(key, 6)

    B, C, H, W = 1, 4, 16, 16
    NUM_ROIS = 32   # 2 ROI blocks -> >= 2 parallel grid steps (v7x megacore)

    image = jax.random.normal(k_img, (B, C, H, W), jnp.float32)
    image_metadata = jnp.array([[float(H), float(W), 1.0]], jnp.float32)
    gt_boxes = jax.random.uniform(k_gt, (1, 3, 5), jnp.float32, 0.0, float(H))

    # synthetic ROIs in (x, y, w, h) format on the feature map grid
    xy = jax.random.uniform(k_roi_xy, (1, NUM_ROIS, 2), jnp.float32, 0.0, 8.0)
    wh = jax.random.uniform(k_roi_wh, (1, NUM_ROIS, 2), jnp.float32, 3.0, 8.0)
    rois = jnp.concatenate([xy, wh], axis=-1)

    params = init_params(k_par, cin=C, cmid=8)

    outs = rfcn_forward(params, image, image_metadata, gt_boxes, rois)
    outs = jax.block_until_ready(outs)

    # exercise the module-level cross_entropy helper (used by ohem_detect_loss)
    cls_prob_fg = outs[1][0, :, 1]                       # (NUM_ROIS,)
    targets = (jax.random.uniform(k_tgt, (NUM_ROIS,)) > 0.5).astype(jnp.float32)
    ce = jax.block_until_ready(cross_entropy(cls_prob_fg, targets))

    assert outs[1].shape == (1, NUM_ROIS, N_CLASSES)
    assert outs[2].shape == (1, NUM_ROIS, 4)
    assert ce.shape == (NUM_ROIS,)
    assert bool(jnp.all(jnp.isfinite(outs[1]))) and bool(jnp.all(jnp.isfinite(ce)))

    print("KERNEL_OK")
</pallas_src>

<mosaic_0001>
module attributes {stable_mosaic.version = 11 : i64} {
  func.func @_conv_chain_kernel(%arg0: i32, %arg1: memref<128x4xbf16, #tpu.memory_space<vmem>>, %arg2: memref<4x8xbf16, #tpu.memory_space<vmem>>, %arg3: memref<1x8xf32, #tpu.memory_space<vmem>>, %arg4: memref<8x8xbf16, #tpu.memory_space<vmem>>, %arg5: memref<1x8xf32, #tpu.memory_space<vmem>>, %arg6: memref<8x128xbf16, #tpu.memory_space<vmem>>, %arg7: memref<1x128xf32, #tpu.memory_space<vmem>>, %arg8: memref<128x128xbf16, #tpu.memory_space<vmem>>) attributes {dimension_semantics = [#tpu.dimension_semantics<parallel>], iteration_bounds = array<i64: 2>, scalar_prefetch = 0 : i64, scratch_operands = 0 : i64, tpu.core_type = #tpu.core_type<tc>, window_params = [{transform_indices = @transform_0, window_bounds = array<i64: 128, 4>}, {pipeline_mode = #tpu.pipeline_mode<synchronous>, transform_indices = @transform_1, window_bounds = array<i64: 4, 8>}, {pipeline_mode = #tpu.pipeline_mode<synchronous>, transform_indices = @transform_2, window_bounds = array<i64: 1, 8>}, {pipeline_mode = #tpu.pipeline_mode<synchronous>, transform_indices = @transform_3, window_bounds = array<i64: 8, 8>}, {pipeline_mode = #tpu.pipeline_mode<synchronous>, transform_indices = @transform_4, window_bounds = array<i64: 1, 8>}, {pipeline_mode = #tpu.pipeline_mode<synchronous>, transform_indices = @transform_5, window_bounds = array<i64: 8, 128>}, {pipeline_mode = #tpu.pipeline_mode<synchronous>, transform_indices = @transform_6, window_bounds = array<i64: 1, 128>}, {transform_indices = @transform_7, window_bounds = array<i64: 128, 128>}]} {
    %c0 = arith.constant 0 : index
    %c0_0 = arith.constant 0 : index
    %0 = vector.load %arg1[%c0, %c0_0] : memref<128x4xbf16, #tpu.memory_space<vmem>>, vector<128x4xbf16>
    %c0_1 = arith.constant 0 : index
    %c0_2 = arith.constant 0 : index
    %1 = vector.load %arg2[%c0_1, %c0_2] : memref<4x8xbf16, #tpu.memory_space<vmem>>, vector<4x8xbf16>
    %cst = arith.constant dense<0.000000e+00> : vector<128x8xf32>
    %2 = tpu.matmul %0, %1, %cst {dimension_numbers = #tpu.dot_dimension_numbers<[1], [0], [0], [1], [0, 0, 1, 1], [], []>} : vector<128x4xbf16>, vector<4x8xbf16>, vector<128x8xf32> -> vector<128x8xf32>
    %c0_3 = arith.constant 0 : index
    %c0_4 = arith.constant 0 : index
    %3 = vector.load %arg3[%c0_3, %c0_4] : memref<1x8xf32, #tpu.memory_space<vmem>>, vector<1x8xf32>
    %4 = vector.broadcast %3 : vector<1x8xf32> to vector<128x8xf32>
    %5 = arith.addf %2, %4 : vector<128x8xf32>
    %cst_5 = arith.constant 0.000000e+00 : f32
    %6 = vector.broadcast %cst_5 : f32 to vector<128x8xf32>
    %7 = arith.maximumf %5, %6 : vector<128x8xf32>
    %8 = arith.truncf %7 : vector<128x8xf32> to vector<128x8xbf16>
    %c0_6 = arith.constant 0 : index
    %c0_7 = arith.constant 0 : index
    %9 = vector.load %arg4[%c0_6, %c0_7] : memref<8x8xbf16, #tpu.memory_space<vmem>>, vector<8x8xbf16>
    %cst_8 = arith.constant dense<0.000000e+00> : vector<128x8xf32>
    %10 = tpu.matmul %8, %9, %cst_8 {dimension_numbers = #tpu.dot_dimension_numbers<[1], [0], [0], [1], [0, 0, 1, 1], [], []>} : vector<128x8xbf16>, vector<8x8xbf16>, vector<128x8xf32> -> vector<128x8xf32>
    %c0_9 = arith.constant 0 : index
    %c0_10 = arith.constant 0 : index
    %11 = vector.load %arg5[%c0_9, %c0_10] : memref<1x8xf32, #tpu.memory_space<vmem>>, vector<1x8xf32>
    %12 = vector.broadcast %11 : vector<1x8xf32> to vector<128x8xf32>
    %13 = arith.addf %10, %12 : vector<128x8xf32>
    %cst_11 = arith.constant 0.000000e+00 : f32
    %14 = vector.broadcast %cst_11 : f32 to vector<128x8xf32>
    %15 = arith.maximumf %13, %14 : vector<128x8xf32>
    %16 = arith.truncf %15 : vector<128x8xf32> to vector<128x8xbf16>
    %c0_12 = arith.constant 0 : index
    %c0_13 = arith.constant 0 : index
    %17 = vector.load %arg6[%c0_12, %c0_13] : memref<8x128xbf16, #tpu.memory_space<vmem>>, vector<8x128xbf16>
    %cst_14 = arith.constant dense<0.000000e+00> : vector<128x128xf32>
    %18 = tpu.matmul %16, %17, %cst_14 {dimension_numbers = #tpu.dot_dimension_numbers<[1], [0], [0], [1], [0, 0, 1, 1], [], []>} : vector<128x8xbf16>, vector<8x128xbf16>, vector<128x128xf32> -> vector<128x128xf32>
    %c0_15 = arith.constant 0 : index
    %c0_16 = arith.constant 0 : index
    %19 = vector.load %arg7[%c0_15, %c0_16] : memref<1x128xf32, #tpu.memory_space<vmem>>, vector<1x128xf32>
    %20 = vector.broadcast %19 : vector<1x128xf32> to vector<128x128xf32>
    %21 = arith.addf %18, %20 : vector<128x128xf32>
    %22 = arith.truncf %21 : vector<128x128xf32> to vector<128x128xbf16>
    %c0_17 = arith.constant 0 : index
    %c0_18 = arith.constant 0 : index
    %23 = vector.load %arg8[%c0_17, %c0_18] : memref<128x128xbf16, #tpu.memory_space<vmem>>, vector<128x128xbf16>
    tpu.vector_store %arg8[%c0_17, %c0_18], %22 {strides = array<i32>} : memref<128x128xbf16, #tpu.memory_space<vmem>>, vector<128x128xbf16>,
    return
  }
  func.func @transform_0(%arg0: i32) -> (i32, i32) {
    %c0_i32 = arith.constant 0 : i32
    %c0_i32_0 = arith.constant 0 : i32
    return %arg0, %c0_i32 : i32, i32
  }
  func.func @transform_1(%arg0: i32) -> (i32, i32) {
    %c0_i32 = arith.constant 0 : i32
    %c0_i32_0 = arith.constant 0 : i32
    %c0_i32_1 = arith.constant 0 : i32
    return %c0_i32, %c0_i32_0 : i32, i32
  }
  func.func @transform_2(%arg0: i32) -> (i32, i32) {
    %c0_i32 = arith.constant 0 : i32
    %c0_i32_0 = arith.constant 0 : i32
    %c0_i32_1 = arith.constant 0 : i32
    return %c0_i32, %c0_i32_0 : i32, i32
  }
  func.func @transform_3(%arg0: i32) -> (i32, i32) {
    %c0_i32 = arith.constant 0 : i32
    %c0_i32_0 = arith.constant 0 : i32
    %c0_i32_1 = arith.constant 0 : i32
    return %c0_i32, %c0_i32_0 : i32, i32
  }
  func.func @transform_4(%arg0: i32) -> (i32, i32) {
    %c0_i32 = arith.constant 0 : i32
    %c0_i32_0 = arith.constant 0 : i32
    %c0_i32_1 = arith.constant 0 : i32
    return %c0_i32, %c0_i32_0 : i32, i32
  }
  func.func @transform_5(%arg0: i32) -> (i32, i32) {
    %c0_i32 = arith.constant 0 : i32
    %c0_i32_0 = arith.constant 0 : i32
    %c0_i32_1 = arith.constant 0 : i32
    return %c0_i32, %c0_i32_0 : i32, i32
  }
  func.func @transform_6(%arg0: i32) -> (i32, i32) {
    %c0_i32 = arith.constant 0 : i32
    %c0_i32_0 = arith.constant 0 : i32
    %c0_i32_1 = arith.constant 0 : i32
    return %c0_i32, %c0_i32_0 : i32, i32
  }
  func.func @transform_7(%arg0: i32) -> (i32, i32) {
    %c0_i32 = arith.constant 0 : i32
    %c0_i32_0 = arith.constant 0 : i32
    return %arg0, %c0_i32 : i32, i32
  }
}

</mosaic_0001>

<llo_original>
// kernel: tpu_custom_call.1
$region0: #{tpu_custom_call.1}
  #allocation0 [shape = 'u32[]', space=smem, size = 0x4, offset = 0x4, fixed_abs, tag = 'smem constant byte address 0x4 - core index']
  #allocation1 [shape = 'u32[144,128]{1,0:T(1,128)}', space=vmem, size = 0x12000, scoped, tag = 'internal scratch']
  %s0 = inlined_call_operand.vmem [shape: bf16[256,4], index: 0, kind: input, shape index: {}]
  %s1 = inlined_call_operand.vmem [shape: bf16[4,8], index: 1, kind: input, shape index: {}]
  %s2 = inlined_call_operand.vmem [shape: f32[1,8], index: 2, kind: input, shape index: {}]
  %s3 = inlined_call_operand.vmem [shape: bf16[8,8], index: 3, kind: input, shape index: {}]
  %s4 = inlined_call_operand.vmem [shape: f32[1,8], index: 4, kind: input, shape index: {}]
  %s5 = inlined_call_operand.vmem [shape: bf16[8,128], index: 5, kind: input, shape index: {}]
  %s6 = inlined_call_operand.vmem [shape: f32[1,128], index: 6, kind: input, shape index: {}]
  %s7 = inlined_call_operand.hbm [shape: bf16[256,128], index: 7, kind: output, shape index: {}]
  %s8 = sld [smem:[#allocation0]]
  $region61: #{tpu_custom_call.1} parent=0
    _
  %s10 = ssub.s32 1, %s8
  %s11 = scalar_select 0, %s10, %s8
  $region1: #{tpu_custom_call.1} parent=0
    #allocation2 [shape = 'u8[65536]{0}', space=vmem, size = 0x10000, scoped, tag = 'output window, operand 0']
    #allocation3 [shape = 's32[2]{0}', space=sflag, size = 0x8, scoped, tag = 'scoped memory for tpu_custom_call.1']
    %12 = vsyncpa [#allocation3], 0
    %s13 = scalar_lea.sflag [#allocation3], 1
    %14 = vsyncpa %s13, 0
    loop: start=0, step=1, limit=4
    $region2: #{tpu_custom_call.1} parent=1 // loop_pre_header
      _
    $region3: #{tpu_custom_call.1} parent=1 // loop_header
      %s16 = sphi 0, %s20
      %p17 = scmp.ge.s32.totalorder %s16, 4
      %s26 = sphi 0, %s28
      %s29 = sphi 0, %s26
      %s30 = sphi 0, %s29
      %s46 = sphi 0, %s30
      %s50 = sphi 0, %s50
      %s52 = sphi 0, %s50
      %s53 = sphi 0, %s52
      %s67 = sphi 0, %s53
      %s71 = sphi 0, %s71
      %s73 = sphi 0, %s71
      %s74 = sphi 0, %s73
      %s88 = sphi 0, %s74
      %s92 = sphi 0, %s92
      %s94 = sphi 0, %s92
      %s95 = sphi 0, %s94
      %s109 = sphi 0, %s95
      %s113 = sphi 0, %s113
      %s115 = sphi 0, %s113
      %s116 = sphi 0, %s115
      %s130 = sphi 0, %s116
      %s134 = sphi 0, %s134
      %s136 = sphi 0, %s134
      %s137 = sphi 0, %s136
      %s151 = sphi 0, %s137
      %s155 = sphi 0, %s155
      %s157 = sphi 0, %s155
      %s158 = sphi 0, %s157
      %s172 = sphi 0, %s158
      %s178 = sphi 0, %s180
      %s181 = sphi 0, %s178
      %s182 = sphi 0, %s181
      %s198 = sphi 0, %s182
    $region4: #{tpu_custom_call.1} parent=1 // loop_header_branch
      %19 = sbr.rel (%p17) target = $region8
    $region5: #{tpu_custom_call.1} parent=1 // loop_body
      %s21 = ssub.s32 %s16, 1
      %s22 = ssub.s32 %s16, 2
      %s23 = sadd.s32 %s16, 1
      %s24 = ssub.s32 %s16, %s23
      %p25 = scmp.eq.s32.totalorder %s24, 0
      %s27 = sadd.s32 %s26, 1
      %s28 = scalar_select %p25, %s26, %s27
      %p31 = pneg %p25
      %p32 = scmp.eq.s32.totalorder %s16, 1
      %p33 = por %p31, %p32
      %p34 = scmp.ne.s32.totalorder %s26, %s29
      %p35 = scmp.eq.s32.totalorder %s16, 0
      %p36 = por %p34, %p35
      %p37 = scmp.ne.s32.totalorder %s26, %s29
      %p38 = scmp.eq.s32.totalorder %s21, 1
      %p39 = por %p37, %p38
      %p40 = scmp.ne.s32.totalorder %s29, %s30
      %p41 = scmp.eq.s32.totalorder %s21, 0
      %p42 = por %p40, %p41
      %p43 = scmp.ne.s32.totalorder %s29, %s30
      %p44 = scmp.eq.s32.totalorder %s22, 1
      %p45 = por %p43, %p44
      %p47 = scmp.ne.s32.totalorder %s30, %s46
      %p48 = scmp.eq.s32.totalorder %s22, 0
      %p49 = por %p47, %p48
      %s51 = sadd.s32 %s50, 1
      %p54 = scmp.eq.s32.totalorder %s16, 1
      %p55 = scmp.ne.s32.totalorder %s50, %s52
      %p56 = scmp.eq.s32.totalorder %s16, 0
      %p57 = por %p55, %p56
      %p58 = scmp.ne.s32.totalorder %s50, %s52
      %p59 = scmp.eq.s32.totalorder %s21, 1
      %p60 = por %p58, %p59
      %p61 = scmp.ne.s32.totalorder %s52, %s53
      %p62 = scmp.eq.s32.totalorder %s21, 0
      %p63 = por %p61, %p62
      %p64 = scmp.ne.s32.totalorder %s52, %s53
      %p65 = scmp.eq.s32.totalorder %s22, 1
      %p66 = por %p64, %p65
      %p68 = scmp.ne.s32.totalorder %s53, %s67
      %p69 = scmp.eq.s32.totalorder %s22, 0
      %p70 = por %p68, %p69
      %s72 = sadd.s32 %s71, 1
      %p75 = scmp.eq.s32.totalorder %s16, 1
      %p76 = scmp.ne.s32.totalorder %s71, %s73
      %p77 = scmp.eq.s32.totalorder %s16, 0
      %p78 = por %p76, %p77
      %p79 = scmp.ne.s32.totalorder %s71, %s73
      %p80 = scmp.eq.s32.totalorder %s21, 1
      %p81 = por %p79, %p80
      %p82 = scmp.ne.s32.totalorder %s73, %s74
      %p83 = scmp.eq.s32.totalorder %s21, 0
      %p84 = por %p82, %p83
      %p85 = scmp.ne.s32.totalorder %s73, %s74
      %p86 = scmp.eq.s32.totalorder %s22, 1
      %p87 = por %p85, %p86
      %p89 = scmp.ne.s32.totalorder %s74, %s88
      %p90 = scmp.eq.s32.totalorder %s22, 0
      %p91 = por %p89, %p90
      %s93 = sadd.s32 %s92, 1
      %p96 = scmp.eq.s32.totalorder %s16, 1
      %p97 = scmp.ne.s32.totalorder %s92, %s94
      %p98 = scmp.eq.s32.totalorder %s16, 0
      %p99 = por %p97, %p98
      %p100 = scmp.ne.s32.totalorder %s92, %s94
      %p101 = scmp.eq.s32.totalorder %s21, 1
      %p102 = por %p100, %p101
      %p103 = scmp.ne.s32.totalorder %s94, %s95
      %p104 = scmp.eq.s32.totalorder %s21, 0
      %p105 = por %p103, %p104
      %p106 = scmp.ne.s32.totalorder %s94, %s95
      %p107 = scmp.eq.s32.totalorder %s22, 1
      %p108 = por %p106, %p107
      %p110 = scmp.ne.s32.totalorder %s95, %s109
      %p111 = scmp.eq.s32.totalorder %s22, 0
      %p112 = por %p110, %p111
      %s114 = sadd.s32 %s113, 1
      %p117 = scmp.eq.s32.totalorder %s16, 1
      %p118 = scmp.ne.s32.totalorder %s113, %s115
      %p119 = scmp.eq.s32.totalorder %s16, 0
      %p120 = por %p118, %p119
      %p121 = scmp.ne.s32.totalorder %s113, %s115
      %p122 = scmp.eq.s32.totalorder %s21, 1
      %p123 = por %p121, %p122
      %p124 = scmp.ne.s32.totalorder %s115, %s116
      %p125 = scmp.eq.s32.totalorder %s21, 0
      %p126 = por %p124, %p125
      %p127 = scmp.ne.s32.totalorder %s115, %s116
      %p128 = scmp.eq.s32.totalorder %s22, 1
      %p129 = por %p127, %p128
      %p131 = scmp.ne.s32.totalorder %s116, %s130
      %p132 = scmp.eq.s32.totalorder %s22, 0
      %p133 = por %p131, %p132
      %s135 = sadd.s32 %s134, 1
      %p138 = scmp.eq.s32.totalorder %s16, 1
      %p139 = scmp.ne.s32.totalorder %s134, %s136
      %p140 = scmp.eq.s32.totalorder %s16, 0
      %p141 = por %p139, %p140
      %p142 = scmp.ne.s32.totalorder %s134, %s136
      %p143 = scmp.eq.s32.totalorder %s21, 1
      %p144 = por %p142, %p143
      %p145 = scmp.ne.s32.totalorder %s136, %s137
      %p146 = scmp.eq.s32.totalorder %s21, 0
      %p147 = por %p145, %p146
      %p148 = scmp.ne.s32.totalorder %s136, %s137
      %p149 = scmp.eq.s32.totalorder %s22, 1
      %p150 = por %p148, %p149
      %p152 = scmp.ne.s32.totalorder %s137, %s151
      %p153 = scmp.eq.s32.totalorder %s22, 0
      %p154 = por %p152, %p153
      %s156 = sadd.s32 %s155, 1
      %p159 = scmp.eq.s32.totalorder %s16, 1
      %p160 = scmp.ne.s32.totalorder %s155, %s157
      %p161 = scmp.eq.s32.totalorder %s16, 0
      %p162 = por %p160, %p161
      %p163 = scmp.ne.s32.totalorder %s155, %s157
      %p164 = scmp.eq.s32.totalorder %s21, 1
      %p165 = por %p163, %p164
      %p166 = scmp.ne.s32.totalorder %s157, %s158
      %p167 = scmp.eq.s32.totalorder %s21, 0
      %p168 = por %p166, %p167
      %p169 = scmp.ne.s32.totalorder %s157, %s158
      %p170 = scmp.eq.s32.totalorder %s22, 1
      %p171 = por %p169, %p170
      %p173 = scmp.ne.s32.totalorder %s158, %s172
      %p174 = scmp.eq.s32.totalorder %s22, 0
      %p175 = por %p173, %p174
      %s176 = ssub.s32 %s16, %s23
      %p177 = scmp.eq.s32.totalorder %s176, 0
      %s179 = sadd.s32 %s178, 1
      %s180 = scalar_select %p177, %s178, %s179
      %p183 = pneg %p177
      %p184 = scmp.eq.s32.totalorder %s16, 1
      %p185 = por %p183, %p184
      %p186 = scmp.ne.s32.totalorder %s178, %s181
      %p187 = scmp.eq.s32.totalorder %s16, 0
      %p188 = por %p186, %p187
      %p189 = scmp.ne.s32.totalorder %s178, %s181
      %p190 = scmp.eq.s32.totalorder %s21, 1
      %p191 = por %p189, %p190
      %p192 = scmp.ne.s32.totalorder %s181, %s182
      %p193 = scmp.eq.s32.totalorder %s21, 0
      %p194 = por %p192, %p193
      %p195 = scmp.ne.s32.totalorder %s181, %s182
      %p196 = scmp.eq.s32.totalorder %s22, 1
      %p197 = por %p195, %p196
      %p199 = scmp.ne.s32.totalorder %s182, %s198
      %p200 = scmp.eq.s32.totalorder %s22, 0
      %p201 = por %p199, %p200
      %p202 = scmp.le.s32.totalorder 1, %s16
      %p203 = scmp.lt.s32.totalorder %s16, 3
      %p204 = pnand %p202, %p203
      %p205 = pneg %p204
      // Predicated region
      $region9: #{tpu_custom_call.1} parent=5 // pred_check
        _
      $region10: #{tpu_custom_call.1} parent=5 // pred_check_branch
        %207 = sbr.rel (%p204) target = $region12
      $region11: #{tpu_custom_call.1} parent=5 // pred_region
        %s208 = ssub.s32 %s16, 1
        // Predicated region
        $region13: #{tpu_custom_call.1} parent=11 // pred_check
          %p209 = pneg %p63
        $region14: #{tpu_custom_call.1} parent=11 // pred_check_branch
          %211 = sbr.rel (%p209) target = $region16
        $region15: #{tpu_custom_call.1} parent=11 // pred_region
          _
        $region16: #{tpu_custom_call.1} parent=11 // pred_fallthru
          _
        // Predicated region
        $region17: #{tpu_custom_call.1} parent=11 // pred_check
          %p212 = pneg %p84
        $region18: #{tpu_custom_call.1} parent=11 // pred_check_branch
          %214 = sbr.rel (%p212) target = $region20
        $region19: #{tpu_custom_call.1} parent=11 // pred_region
          _
        $region20: #{tpu_custom_call.1} parent=11 // pred_fallthru
          _
        // Predicated region
        $region21: #{tpu_custom_call.1} parent=11 // pred_check
          %p215 = pneg %p105
        $region22: #{tpu_custom_call.1} parent=11 // pred_check_branch
          %217 = sbr.rel (%p215) target = $region24
        $region23: #{tpu_custom_call.1} parent=11 // pred_region
          _
        $region24: #{tpu_custom_call.1} parent=11 // pred_fallthru
          _
        // Predicated region
        $region25: #{tpu_custom_call.1} parent=11 // pred_check
          %p218 = pneg %p126
        $region26: #{tpu_custom_call.1} parent=11 // pred_check_branch
          %220 = sbr.rel (%p218) target = $region28
        $region27: #{tpu_custom_call.1} parent=11 // pred_region
          _
        $region28: #{tpu_custom_call.1} parent=11 // pred_fallthru
          _
        // Predicated region
        $region29: #{tpu_custom_call.1} parent=11 // pred_check
          %p221 = pneg %p147
        $region30: #{tpu_custom_call.1} parent=11 // pred_check_branch
          %223 = sbr.rel (%p221) target = $region32
        $region31: #{tpu_custom_call.1} parent=11 // pred_region
          _
        $region32: #{tpu_custom_call.1} parent=11 // pred_fallthru
          _
        // Predicated region
        $region33: #{tpu_custom_call.1} parent=11 // pred_check
          %p224 = pneg %p168
        $region34: #{tpu_custom_call.1} parent=11 // pred_check_branch
          %226 = sbr.rel (%p224) target = $region36
        $region35: #{tpu_custom_call.1} parent=11 // pred_region
          _
        $region36: #{tpu_custom_call.1} parent=11 // pred_fallthru
          _
      $region12: #{tpu_custom_call.1} parent=5 // pred_fallthru
        _
      %p227 = scmp.lt.s32.totalorder %s16, 2
      // Predicated region
      $region37: #{tpu_custom_call.1} parent=5 // pred_check
        %p228 = pneg %p227
      $region38: #{tpu_custom_call.1} parent=5 // pred_check_branch
        %230 = sbr.rel (%p228) target = $region40
      $region39: #{tpu_custom_call.1} parent=5 // pred_region
        // Predicated region
        $region41: #{tpu_custom_call.1} parent=39 // pred_check
          %p231 = pneg %p36
        $region42: #{tpu_custom_call.1} parent=39 // pred_check_branch
          %233 = sbr.rel (%p231) target = $region44
        $region43: #{tpu_custom_call.1} parent=39 // pred_region
          %s234 = smul.u32 16, %s16
          %p235 = scmp.lt.s32.totalorder %s234, 31
          %s236 = scalar_select %p235, %s234, 31
          %s237 = smul.addr %s236, 4
          %s238 = scalar_lea.vmem %s0, %s237
          %s239 = smul.u32 16, %s16
        $region44: #{tpu_custom_call.1} parent=39 // pred_fallthru
          _
      $region40: #{tpu_custom_call.1} parent=5 // pred_fallthru
        _
      %p240 = scmp.le.s32.totalorder 1, %s16
      %p241 = scmp.lt.s32.totalorder %s16, 3
      %p242 = pnand %p240, %p241
      %p243 = pneg %p242
      // Predicated region
      $region45: #{tpu_custom_call.1} parent=5 // pred_check
        _
      $region46: #{tpu_custom_call.1} parent=5 // pred_check_branch
        %245 = sbr.rel (%p242) target = $region48
      $region47: #{tpu_custom_call.1} parent=5 // pred_region
        %s246 = ssub.s32 %s16, 1
        %s247 = smul.u32 16, %s21
        %p248 = scmp.lt.s32.totalorder %s247, 31
        %s249 = scalar_select %p248, %s247, 31
        %s250 = smul.addr %s249, 4
        %s251 = scalar_lea.vmem %s0, %s250
        %p252 = pneg %p42
        %p253 = pneg %p39
        %p254 = pneg %p63
        %p255 = pneg %p60
        %p256 = pneg %p84
        %p257 = pneg %p81
        %p258 = pneg %p105
        %p259 = pneg %p102
        %p260 = pneg %p126
        %p261 = pneg %p123
        %p262 = pneg %p147
        %p263 = pneg %p144
        %p264 = pneg %p168
        %p265 = pneg %p165
        %p266 = pneg %p194
        %p267 = pneg %p191
        %s268 = sand.u32 %s181, 1
        %s269 = scalar_lea.sflag [#allocation3], %s268
        %s270 = sand.u32 %s181, 1
        %s271 = smul.addr %s270, 64
        %s272 = scalar_lea.vmem [#allocation2], %s271
        %s273 = smul.u32 16, %s21
        %p274 = scmp.lt.s32.totalorder %s273, 31
        %s275 = scalar_select %p274, %s273, 31
        %s276 = smul.addr %s275, 4
        %s277 = scalar_lea.vmem %s0, %s276
        %s278 = smul.u32 16, %s21
        %s279 = smul.u32 16, %s21
        %v281 = vld [vmem:[%s277] sm:$0xf]
        %v282 = vld [vmem:[%s277 + $0x4] sm:$0xf]
        %v283 = vld [vmem:[%s277 + $0x8] sm:$0xf]
        %v284 = vld [vmem:[%s277 + $0xc] sm:$0xf]
        %v285 = vld [vmem:[%s277 + $0x10] sm:$0xf]
        %v286 = vld [vmem:[%s277 + $0x14] sm:$0xf]
        %v287 = vld [vmem:[%s277 + $0x18] sm:$0xf]
        %v288 = vld [vmem:[%s277 + $0x1c] sm:$0xf]
        %v289 = vld [vmem:[%s277 + $0x20] sm:$0xf]
        %v290 = vld [vmem:[%s277 + $0x24] sm:$0xf]
        %v291 = vld [vmem:[%s277 + $0x28] sm:$0xf]
        %v292 = vld [vmem:[%s277 + $0x2c] sm:$0xf]
        %v293 = vld [vmem:[%s277 + $0x30] sm:$0xf]
        %v294 = vld [vmem:[%s277 + $0x34] sm:$0xf]
        %v295 = vld [vmem:[%s277 + $0x38] sm:$0xf]
        %v296 = vld [vmem:[%s277 + $0x3c] sm:$0xf]
        %v297 = vld [vmem:[%s1] sm:$0x3]
        %v298 = vld [vmem:[%s2] sm:$0x1]
        %v300 = vlaneseq
        %v301 = vshrl.u32 %v300, 7
        %v302 = vsub.s32 0, %v301
        %v303 = vrot.slane %v298, %v302
        %v321 = vunpack.c.l.b16 %v281
        %v322 = vunpack.c.l.b16 %v282
        %v323 = vunpack.c.l.b16 %v283
        %v324 = vunpack.c.l.b16 %v284
        %v325 = vunpack.c.l.b16 %v285
        %v326 = vunpack.c.l.b16 %v286
        %v327 = vunpack.c.l.b16 %v287
        %v328 = vunpack.c.l.b16 %v288
        %v329 = vunpack.c.l.b16 %v289
        %v330 = vunpack.c.l.b16 %v290
        %v331 = vunpack.c.l.b16 %v291
        %v332 = vunpack.c.l.b16 %v292
        %v333 = vunpack.c.l.b16 %v293
        %v334 = vunpack.c.l.b16 %v294
        %v335 = vunpack.c.l.b16 %v295
        %v336 = vunpack.c.l.b16 %v296
        %v337 = vpack.c.b16 %v322, %v321
        %v338 = vpack.c.b16 %v324, %v323
        %v339 = vpack.c.b16 %v326, %v325
        %v340 = vpack.c.b16 %v328, %v327
        %v341 = vpack.c.b16 %v330, %v329
        %v342 = vpack.c.b16 %v332, %v331
        %v343 = vpack.c.b16 %v334, %v333
        %v344 = vpack.c.b16 %v336, %v335
        %vm345 = vcmask 31744
        %v347 = vsel %vm345, %v337, 0
        %v350 = vsel %vm345, %v338, 0
        %v353 = vsel %vm345, %v339, 0
        %v356 = vsel %vm345, %v340, 0
        %v359 = vsel %vm345, %v341, 0
        %v362 = vsel %vm345, %v342, 0
        %v365 = vsel %vm345, %v343, 0
        %v368 = vsel %vm345, %v344, 0
        %vm370 = vcmask 1041408
        %v372 = vsel %vm370, %v297, 0
        %374 = vmatprep.subr.bf16.mxu0 0
        %375 = vmatpush1.bf16.msra.mxu0 %v372
        %376 = vmatprep.subr.bf16.mxu0 0
        %377 = vmatpush1.bf16.msra.mxu0 0
        %378 = vmatprep.subr.bf16.mxu0 0
        %379 = vmatpush1.bf16.msra.mxu0 0
        %380 = vmatprep.subr.bf16.mxu0 0
        %381 = vmatpush1.bf16.msra.mxu0 0
        %382 = vmatprep.subr.bf16.mxu0 0
        %383 = vmatpush1.bf16.msra.mxu0 0
        %384 = vmatprep.subr.bf16.mxu0 0
        %385 = vmatpush1.bf16.msra.mxu0 0
        %386 = vmatprep.subr.bf16.mxu0 0
        %387 = vmatpush1.bf16.msra.mxu0 0
        %388 = vmatprep.subr.bf16.mxu0 0
        %389 = vmatpush1.bf16.msra.mxu0 0
        %390 = vmatprep.subr.bf16.mxu0 0
        %391 = vmatpush1.bf16.msra.mxu0 0
        %392 = vmatprep.subr.bf16.mxu0 0
        %393 = vmatpush1.bf16.msra.mxu0 0
        %394 = vmatprep.subr.bf16.mxu0 0
        %395 = vmatpush1.bf16.msra.mxu0 0
        %396 = vmatprep.subr.bf16.mxu0 0
        %397 = vmatpush1.bf16.msra.mxu0 0
        %398 = vmatprep.subr.bf16.mxu0 0
        %399 = vmatpush1.bf16.msra.mxu0 0
        %400 = vmatprep.subr.bf16.mxu0 0
        %401 = vmatpush1.bf16.msra.mxu0 0
        %402 = vmatprep.subr.bf16.mxu0 0
        %403 = vmatpush1.bf16.msra.mxu0 0
        %404 = vmatprep.subr.bf16.mxu0 0
        %405 = vmatpush1.bf16.msra.mxu0 0
        %406 = vmatprep.mubr.bf16.mxu0 0
        %407 = vmatmul.mubr.bf16.gmra.mrb[0].mxu0 %v347
        %v408 = vpop.f32.mrb[0].mxu0
        %v409 = vadd.f32 %v303, %v408
        %v410 = vpop.f32.mrb[0].mxu0
        %v411 = vpop.f32.mrb[0].mxu0
        %v412 = vadd.f32 %v303, %v411
        %v413 = vpop.f32.mrb[0].mxu0
        %414 = vmatprep.mubr.bf16.mxu0 0
        %415 = vmatmul.mubr.bf16.gmra.mrb[0].mxu0 %v350
        %v416 = vpop.f32.mrb[0].mxu0
        %v417 = vadd.f32 %v303, %v416
        %v418 = vpop.f32.mrb[0].mxu0
        %v419 = vpop.f32.mrb[0].mxu0
        %v420 = vadd.f32 %v303, %v419
        %v421 = vpop.f32.mrb[0].mxu0
        %422 = vmatprep.mubr.bf16.mxu0 0
        %423 = vmatmul.mubr.bf16.gmra.mrb[0].mxu0 %v353
        %v424 = vpop.f32.mrb[0].mxu0
        %v425 = vadd.f32 %v303, %v424
        %v426 = vpop.f32.mrb[0].mxu0
        %v427 = vpop.f32.mrb[0].mxu0
        %v428 = vadd.f32 %v303, %v427
        %v429 = vpop.f32.mrb[0].mxu0
        %430 = vmatprep.mubr.bf16.mxu0 0
        %431 = vmatmul.mubr.bf16.gmra.mrb[0].mxu0 %v356
        %v432 = vpop.f32.mrb[0].mxu0
        %v433 = vadd.f32 %v303, %v432
        %v434 = vpop.f32.mrb[0].mxu0
        %v435 = vpop.f32.mrb[0].mxu0
        %v436 = vadd.f32 %v303, %v435
        %v437 = vpop.f32.mrb[0].mxu0
        %438 = vmatprep.mubr.bf16.mxu0 0
        %439 = vmatmul.mubr.bf16.gmra.mrb[0].mxu0 %v359
        %v440 = vpop.f32.mrb[0].mxu0
        %v441 = vadd.f32 %v303, %v440
        %v442 = vpop.f32.mrb[0].mxu0
        %v443 = vpop.f32.mrb[0].mxu0
        %v444 = vadd.f32 %v303, %v443
        %v445 = vpop.f32.mrb[0].mxu0
        %446 = vmatprep.mubr.bf16.mxu0 0
        %447 = vmatmul.mubr.bf16.gmra.mrb[0].mxu0 %v362
        %v448 = vpop.f32.mrb[0].mxu0
        %v449 = vadd.f32 %v303, %v448
        %v450 = vpop.f32.mrb[0].mxu0
        %v451 = vpop.f32.mrb[0].mxu0
        %v452 = vadd.f32 %v303, %v451
        %v453 = vpop.f32.mrb[0].mxu0
        %454 = vmatprep.mubr.bf16.mxu0 0
        %455 = vmatmul.mubr.bf16.gmra.mrb[0].mxu0 %v365
        %v456 = vpop.f32.mrb[0].mxu0
        %v457 = vadd.f32 %v303, %v456
        %v458 = vpop.f32.mrb[0].mxu0
        %v459 = vpop.f32.mrb[0].mxu0
        %v460 = vadd.f32 %v303, %v459
        %v461 = vpop.f32.mrb[0].mxu0
        %462 = vmatprep.mubr.bf16.mxu0 0
        %463 = vmatmul.mubr.bf16.gmra.mrb[0].mxu0 %v368
        %v464 = vpop.f32.mrb[0].mxu0
        %v465 = vadd.f32 %v303, %v464
        %v466 = vpop.f32.mrb[0].mxu0
        %v467 = vpop.f32.mrb[0].mxu0
        %v468 = vadd.f32 %v303, %v467
        %v469 = vpop.f32.mrb[0].mxu0
        %470 = vdwg.mxu0
        %v471 = vmax.f32 %v409, 0.0
        %v472 = vmax.f32 %v412, 0.0
        %v473 = vmax.f32 %v417, 0.0
        %v474 = vmax.f32 %v420, 0.0
        %v475 = vmax.f32 %v425, 0.0
        %v476 = vmax.f32 %v428, 0.0
        %v477 = vmax.f32 %v433, 0.0
        %v478 = vmax.f32 %v436, 0.0
        %v479 = vmax.f32 %v441, 0.0
        %v480 = vmax.f32 %v444, 0.0
        %v481 = vmax.f32 %v449, 0.0
        %v482 = vmax.f32 %v452, 0.0
        %v483 = vmax.f32 %v457, 0.0
        %v484 = vmax.f32 %v460, 0.0
        %v485 = vmax.f32 %v465, 0.0
        %v486 = vmax.f32 %v468, 0.0
        %v487 = vpack.c.bf16 %v472, %v471
        %v488 = vpack.c.bf16 %v474, %v473
        %v489 = vpack.c.bf16 %v476, %v475
        %v490 = vpack.c.bf16 %v478, %v477
        %v491 = vpack.c.bf16 %v480, %v479
        %v492 = vpack.c.bf16 %v482, %v481
        %v493 = vpack.c.bf16 %v484, %v483
        %v494 = vpack.c.bf16 %v486, %v485
        %v495 = vld [vmem:[%s3] sm:$0xf]
        %v496 = vld [vmem:[%s4] sm:$0x1]
        %v498 = vlaneseq
        %v499 = vshrl.u32 %v498, 7
        %v500 = vsub.s32 0, %v499
        %v501 = vrot.slane %v496, %v500
        %vm503 = vcmask 64512
        %v505 = vsel %vm503, %v487, 0
        %v508 = vsel %vm503, %v488, 0
        %v511 = vsel %vm503, %v489, 0
        %v514 = vsel %vm503, %v490, 0
        %v517 = vsel %vm503, %v491, 0
        %v520 = vsel %vm503, %v492, 0
        %v523 = vsel %vm503, %v493, 0
        %v526 = vsel %vm503, %v494, 0
        %vm528 = vcmask 1043456
        %v530 = vsel %vm528, %v495, 0
        %532 = vmatprep.subr.bf16.mxu0 0
        %533 = vmatpush1.bf16.msra.mxu0 %v530
        %534 = vmatprep.subr.bf16.mxu0 0
        %535 = vmatpush1.bf16.msra.mxu0 0
        %536 = vmatprep.subr.bf16.mxu0 0
        %537 = vmatpush1.bf16.msra.mxu0 0
        %538 = vmatprep.subr.bf16.mxu0 0
        %539 = vmatpush1.bf16.msra.mxu0 0
        %540 = vmatprep.subr.bf16.mxu0 0
        %541 = vmatpush1.bf16.msra.mxu0 0
        %542 = vmatprep.subr.bf16.mxu0 0
        %543 = vmatpush1.bf16.msra.mxu0 0
        %544 = vmatprep.subr.bf16.mxu0 0
        %545 = vmatpush1.bf16.msra.mxu0 0
        %546 = vmatprep.subr.bf16.mxu0 0
        %547 = vmatpush1.bf16.msra.mxu0 0
        %548 = vmatprep.subr.bf16.mxu0 0
        %549 = vmatpush1.bf16.msra.mxu0 0
        %550 = vmatprep.subr.bf16.mxu0 0
        %551 = vmatpush1.bf16.msra.mxu0 0
        %552 = vmatprep.subr.bf16.mxu0 0
        %553 = vmatpush1.bf16.msra.mxu0 0
        %554 = vmatprep.subr.bf16.mxu0 0
        %555 = vmatpush1.bf16.msra.mxu0 0
        %556 = vmatprep.subr.bf16.mxu0 0
        %557 = vmatpush1.bf16.msra.mxu0 0
        %558 = vmatprep.subr.bf16.mxu0 0
        %559 = vmatpush1.bf16.msra.mxu0 0
        %560 = vmatprep.subr.bf16.mxu0 0
        %561 = vmatpush1.bf16.msra.mxu0 0
        %562 = vmatprep.subr.bf16.mxu0 0
        %563 = vmatpush1.bf16.msra.mxu0 0
        %564 = vmatprep.mubr.bf16.mxu0 0
        %565 = vmatmul.mubr.bf16.gmra.mrb[0].mxu0 %v505
        %v566 = vpop.f32.mrb[0].mxu0
        %v567 = vadd.f32 %v501, %v566
        %v568 = vpop.f32.mrb[0].mxu0
        %v569 = vpop.f32.mrb[0].mxu0
        %v570 = vadd.f32 %v501, %v569
        %v571 = vpop.f32.mrb[0].mxu0
        %572 = vmatprep.mubr.bf16.mxu0 0
        %573 = vmatmul.mubr.bf16.gmra.mrb[0].mxu0 %v508
        %v574 = vpop.f32.mrb[0].mxu0
        %v575 = vadd.f32 %v501, %v574
        %v576 = vpop.f32.mrb[0].mxu0
        %v577 = vpop.f32.mrb[0].mxu0
        %v578 = vadd.f32 %v501, %v577
        %v579 = vpop.f32.mrb[0].mxu0
        %580 = vmatprep.mubr.bf16.mxu0 0
        %581 = vmatmul.mubr.bf16.gmra.mrb[0].mxu0 %v511
        %v582 = vpop.f32.mrb[0].mxu0
        %v583 = vadd.f32 %v501, %v582
        %v584 = vpop.f32.mrb[0].mxu0
        %v585 = vpop.f32.mrb[0].mxu0
        %v586 = vadd.f32 %v501, %v585
        %v587 = vpop.f32.mrb[0].mxu0
        %588 = vmatprep.mubr.bf16.mxu0 0
        %589 = vmatmul.mubr.bf16.gmra.mrb[0].mxu0 %v514
        %v590 = vpop.f32.mrb[0].mxu0
        %v591 = vadd.f32 %v501, %v590
        %v592 = vpop.f32.mrb[0].mxu0
        %v593 = vpop.f32.mrb[0].mxu0
        %v594 = vadd.f32 %v501, %v593
        %v595 = vpop.f32.mrb[0].mxu0
        %596 = vmatprep.mubr.bf16.mxu0 0
        %597 = vmatmul.mubr.bf16.gmra.mrb[0].mxu0 %v517
        %v598 = vpop.f32.mrb[0].mxu0
        %v599 = vadd.f32 %v501, %v598
        %v600 = vpop.f32.mrb[0].mxu0
        %v601 = vpop.f32.mrb[0].mxu0
        %v602 = vadd.f32 %v501, %v601
        %v603 = vpop.f32.mrb[0].mxu0
        %604 = vmatprep.mubr.bf16.mxu0 0
        %605 = vmatmul.mubr.bf16.gmra.mrb[0].mxu0 %v520
        %v606 = vpop.f32.mrb[0].mxu0
        %v607 = vadd.f32 %v501, %v606
        %v608 = vpop.f32.mrb[0].mxu0
        %v609 = vpop.f32.mrb[0].mxu0
        %v610 = vadd.f32 %v501, %v609
        %v611 = vpop.f32.mrb[0].mxu0
        %612 = vmatprep.mubr.bf16.mxu0 0
        %613 = vmatmul.mubr.bf16.gmra.mrb[0].mxu0 %v523
        %v614 = vpop.f32.mrb[0].mxu0
        %v615 = vadd.f32 %v501, %v614
        %v616 = vpop.f32.mrb[0].mxu0
        %v617 = vpop.f32.mrb[0].mxu0
        %v618 = vadd.f32 %v501, %v617
        %v619 = vpop.f32.mrb[0].mxu0
        %620 = vmatprep.mubr.bf16.mxu0 0
        %621 = vmatmul.mubr.bf16.gmra.mrb[0].mxu0 %v526
        %v622 = vpop.f32.mrb[0].mxu0
        %v623 = vadd.f32 %v501, %v622
        %v624 = vpop.f32.mrb[0].mxu0
        %v625 = vpop.f32.mrb[0].mxu0
        %v626 = vadd.f32 %v501, %v625
        %v627 = vpop.f32.mrb[0].mxu0
        %628 = vdwg.mxu0
        %v629 = vmax.f32 %v567, 0.0
        %v630 = vmax.f32 %v570, 0.0
        %v631 = vmax.f32 %v575, 0.0
        %v632 = vmax.f32 %v578, 0.0
        %v633 = vmax.f32 %v583, 0.0
        %v634 = vmax.f32 %v586, 0.0
        %v635 = vmax.f32 %v591, 0.0
        %v636 = vmax.f32 %v594, 0.0
        %v637 = vmax.f32 %v599, 0.0
        %v638 = vmax.f32 %v602, 0.0
        %v639 = vmax.f32 %v607, 0.0
        %v640 = vmax.f32 %v610, 0.0
        %v641 = vmax.f32 %v615, 0.0
        %v642 = vmax.f32 %v618, 0.0
        %v643 = vmax.f32 %v623, 0.0
        %v644 = vmax.f32 %v626, 0.0
        %v645 = vpack.c.bf16 %v630, %v629
        %v646 = vpack.c.bf16 %v632, %v631
        %v647 = vpack.c.bf16 %v634, %v633
        %v648 = vpack.c.bf16 %v636, %v635
        %v649 = vpack.c.bf16 %v638, %v637
        %v650 = vpack.c.bf16 %v640, %v639
        %v651 = vpack.c.bf16 %v642, %v641
        %v652 = vpack.c.bf16 %v644, %v643
        %v653 = vld [vmem:[%s5] sm:$0xf]
        %v654 = vld [vmem:[%s6] sm:$0x1]
        %v656 = vlaneseq
        %v657 = vshrl.u32 %v656, 7
        %v658 = vsub.s32 0, %v657
        %v659 = vrot.slane %v654, %v658
        %v662 = vsel %vm503, %v645, 0
        %v665 = vsel %vm503, %v646, 0
        %v668 = vsel %vm503, %v647, 0
        %v671 = vsel %vm503, %v648, 0
        %v674 = vsel %vm503, %v649, 0
        %v677 = vsel %vm503, %v650, 0
        %v680 = vsel %vm503, %v651, 0
        %v683 = vsel %vm503, %v652, 0
        %v686 = vsel %vm528, %v653, 0
        %688 = vmatprep.subr.bf16.mxu0 0
        %689 = vmatpush1.bf16.msra.mxu0 %v686
        %690 = vmatprep.subr.bf16.mxu0 0
        %691 = vmatpush1.bf16.msra.mxu0 0
        %692 = vmatprep.subr.bf16.mxu0 0
        %693 = vmatpush1.bf16.msra.mxu0 0
        %694 = vmatprep.subr.bf16.mxu0 0
        %695 = vmatpush1.bf16.msra.mxu0 0
        %696 = vmatprep.subr.bf16.mxu0 0
        %697 = vmatpush1.bf16.msra.mxu0 0
        %698 = vmatprep.subr.bf16.mxu0 0
        %699 = vmatpush1.bf16.msra.mxu0 0
        %700 = vmatprep.subr.bf16.mxu0 0
        %701 = vmatpush1.bf16.msra.mxu0 0
        %702 = vmatprep.subr.bf16.mxu0 0
        %703 = vmatpush1.bf16.msra.mxu0 0
        %704 = vmatprep.subr.bf16.mxu0 0
        %705 = vmatpush1.bf16.msra.mxu0 0
        %706 = vmatprep.subr.bf16.mxu0 0
        %707 = vmatpush1.bf16.msra.mxu0 0
        %708 = vmatprep.subr.bf16.mxu0 0
        %709 = vmatpush1.bf16.msra.mxu0 0
        %710 = vmatprep.subr.bf16.mxu0 0
        %711 = vmatpush1.bf16.msra.mxu0 0
        %712 = vmatprep.subr.bf16.mxu0 0
        %713 = vmatpush1.bf16.msra.mxu0 0
        %714 = vmatprep.subr.bf16.mxu0 0
        %715 = vmatpush1.bf16.msra.mxu0 0
        %716 = vmatprep.subr.bf16.mxu0 0
        %717 = vmatpush1.bf16.msra.mxu0 0
        %718 = vmatprep.subr.bf16.mxu0 0
        %719 = vmatpush1.bf16.msra.mxu0 0
        %720 = vmatprep.mubr.bf16.mxu0 0
        %721 = vmatmul.mubr.bf16.gmra.mrb[0].mxu0 %v662
        %v722 = vpop.f32.mrb[0].mxu0
        %v723 = vadd.f32 %v659, %v722
        %v724 = vpop.f32.mrb[0].mxu0
        %v725 = vpop.f32.mrb[0].mxu0
        %v726 = vadd.f32 %v659, %v725
        %v727 = vpop.f32.mrb[0].mxu0
        %728 = vmatprep.mubr.bf16.mxu0 0
        %729 = vmatmul.mubr.bf16.gmra.mrb[0].mxu0 %v665
        %v730 = vpop.f32.mrb[0].mxu0
        %v731 = vadd.f32 %v659, %v730
        %v732 = vpop.f32.mrb[0].mxu0
        %v733 = vpop.f32.mrb[0].mxu0
        %v734 = vadd.f32 %v659, %v733
        %v735 = vpop.f32.mrb[0].mxu0
        %736 = vmatprep.mubr.bf16.mxu0 0
        %737 = vmatmul.mubr.bf16.gmra.mrb[0].mxu0 %v668
        %v738 = vpop.f32.mrb[0].mxu0
        %v739 = vadd.f32 %v659, %v738
        %v740 = vpop.f32.mrb[0].mxu0
        %v741 = vpop.f32.mrb[0].mxu0
        %v742 = vadd.f32 %v659, %v741
        %v743 = vpop.f32.mrb[0].mxu0
        %744 = vmatprep.mubr.bf16.mxu0 0
        %745 = vmatmul.mubr.bf16.gmra.mrb[0].mxu0 %v671
        %v746 = vpop.f32.mrb[0].mxu0
        %v747 = vadd.f32 %v659, %v746
        %v748 = vpop.f32.mrb[0].mxu0
        %v749 = vpop.f32.mrb[0].mxu0
        %v750 = vadd.f32 %v659, %v749
        %v751 = vpop.f32.mrb[0].mxu0
        %752 = vmatprep.mubr.bf16.mxu0 0
        %753 = vmatmul.mubr.bf16.gmra.mrb[0].mxu0 %v674
        %v754 = vpop.f32.mrb[0].mxu0
        %v755 = vadd.f32 %v659, %v754
        %v756 = vpop.f32.mrb[0].mxu0
        %v757 = vpop.f32.mrb[0].mxu0
        %v758 = vadd.f32 %v659, %v757
        %v759 = vpop.f32.mrb[0].mxu0
        %760 = vmatprep.mubr.bf16.mxu0 0
        %761 = vmatmul.mubr.bf16.gmra.mrb[0].mxu0 %v677
        %v762 = vpop.f32.mrb[0].mxu0
        %v763 = vadd.f32 %v659, %v762
        %v764 = vpop.f32.mrb[0].mxu0
        %v765 = vpop.f32.mrb[0].mxu0
        %v766 = vadd.f32 %v659, %v765
        %v767 = vpop.f32.mrb[0].mxu0
        %768 = vmatprep.mubr.bf16.mxu0 0
        %769 = vmatmul.mubr.bf16.gmra.mrb[0].mxu0 %v680
        %v770 = vpop.f32.mrb[0].mxu0
        %v771 = vadd.f32 %v659, %v770
        %v772 = vpop.f32.mrb[0].mxu0
        %v773 = vpop.f32.mrb[0].mxu0
        %v774 = vadd.f32 %v659, %v773
        %v775 = vpop.f32.mrb[0].mxu0
        %776 = vmatprep.mubr.bf16.mxu0 0
        %777 = vmatmul.mubr.bf16.gmra.mrb[0].mxu0 %v683
        %v778 = vpop.f32.mrb[0].mxu0
        %v779 = vadd.f32 %v659, %v778
        %v780 = vpop.f32.mrb[0].mxu0
        %v781 = vpop.f32.mrb[0].mxu0
        %v782 = vadd.f32 %v659, %v781
        %v783 = vpop.f32.mrb[0].mxu0
        %784 = vdwg.mxu0
        %v785 = vpack.c.bf16 %v726, %v723
        %v786 = vpack.c.bf16 %v734, %v731
        %v787 = vpack.c.bf16 %v742, %v739
        %v788 = vpack.c.bf16 %v750, %v747
        %v789 = vpack.c.bf16 %v758, %v755
        %v790 = vpack.c.bf16 %v766, %v763
        %v791 = vpack.c.bf16 %v774, %v771
        %v792 = vpack.c.bf16 %v782, %v779
        %v801 = vunpack.c.l.b16 %v785
        %v802 = vunpack.c.h.b16 %v785
        %v803 = vunpack.c.l.b16 %v786
        %v804 = vunpack.c.h.b16 %v786
        %v805 = vunpack.c.l.b16 %v787
        %v806 = vunpack.c.h.b16 %v787
        %v807 = vunpack.c.l.b16 %v788
        %v808 = vunpack.c.h.b16 %v788
        %v809 = vunpack.c.l.b16 %v789
        %v810 = vunpack.c.h.b16 %v789
        %v811 = vunpack.c.l.b16 %v790
        %v812 = vunpack.c.h.b16 %v790
        %v813 = vunpack.c.l.b16 %v791
        %v814 = vunpack.c.h.b16 %v791
        %v815 = vunpack.c.l.b16 %v792
        %v816 = vunpack.c.h.b16 %v792
        %v817 = vpack.c.b16 %v801, %v801
        %v818 = vpack.c.b16 %v802, %v802
        %v819 = vpack.c.b16 %v803, %v803
        %v820 = vpack.c.b16 %v804, %v804
        %v821 = vpack.c.b16 %v805, %v805
        %v822 = vpack.c.b16 %v806, %v806
        %v823 = vpack.c.b16 %v807, %v807
        %v824 = vpack.c.b16 %v808, %v808
        %v825 = vpack.c.b16 %v809, %v809
        %v826 = vpack.c.b16 %v810, %v810
        %v827 = vpack.c.b16 %v811, %v811
        %v828 = vpack.c.b16 %v812, %v812
        %v829 = vpack.c.b16 %v813, %v813
        %v830 = vpack.c.b16 %v814, %v814
        %v831 = vpack.c.b16 %v815, %v815
        %v832 = vpack.c.b16 %v816, %v816
        %849 = vst [vmem:[%s272] sm:$0xf] %v817
        %850 = vst [vmem:[%s272 + $0x4] sm:$0xf] %v818
        %851 = vst [vmem:[%s272 + $0x8] sm:$0xf] %v819
        %852 = vst [vmem:[%s272 + $0xc] sm:$0xf] %v820
        %853 = vst [vmem:[%s272 + $0x10] sm:$0xf] %v821
        %854 = vst [vmem:[%s272 + $0x14] sm:$0xf] %v822
        %855 = vst [vmem:[%s272 + $0x18] sm:$0xf] %v823
        %856 = vst [vmem:[%s272 + $0x1c] sm:$0xf] %v824
        %857 = vst [vmem:[%s272 + $0x20] sm:$0xf] %v825
        %858 = vst [vmem:[%s272 + $0x24] sm:$0xf] %v826
        %859 = vst [vmem:[%s272 + $0x28] sm:$0xf] %v827
        %860 = vst [vmem:[%s272 + $0x2c] sm:$0xf] %v828
        %861 = vst [vmem:[%s272 + $0x30] sm:$0xf] %v829
        %862 = vst [vmem:[%s272 + $0x34] sm:$0xf] %v830
        %863 = vst [vmem:[%s272 + $0x38] sm:$0xf] %v831
        %864 = vst [vmem:[%s272 + $0x3c] sm:$0xf] %v832
        %s865 = sand.u32 %s181, 1
        %s866 = scalar_lea.sflag [#allocation3], %s865
        %s867 = sand.u32 %s181, 1
        %s868 = smul.addr %s867, 64
        %s869 = scalar_lea.vmem [#allocation2], %s868
        // Predicated region
        $region49: #{tpu_custom_call.1} parent=47 // pred_check
          %p870 = pneg %p191
        $region50: #{tpu_custom_call.1} parent=47 // pred_check_branch
          %872 = sbr.rel (%p870) target = $region52
        $region51: #{tpu_custom_call.1} parent=47 // pred_region
          %s873 = smul.u32 16, %s21
          %s875 = ssub.s32 1024, 1024
          %876 = vsyncadd %s866, %s875
          %s877 = smul.addr %s873, 64
          %s878 = scalar_lea.hbm %s7, %s877
          %s879 = sshll.u32 %s869, 4
          %s880 = int_to_ptr.vmem [resolvable:$true] %s879
          %885 = dma.vmem_to_hbm [thread:$0]  %s880, 1024, %s878, %s866, 64, 64, 4
        $region52: #{tpu_custom_call.1} parent=47 // pred_fallthru
          _
      $region48: #{tpu_custom_call.1} parent=5 // pred_fallthru
        _
      %p886 = scmp.le.s32.totalorder 2, %s16
      // Predicated region
      $region53: #{tpu_custom_call.1} parent=5 // pred_check
        %p887 = pneg %p886
      $region54: #{tpu_custom_call.1} parent=5 // pred_check_branch
        %889 = sbr.rel (%p887) target = $region56
      $region55: #{tpu_custom_call.1} parent=5 // pred_region
        %s890 = ssub.s32 %s16, 2
        // Predicated region
        $region57: #{tpu_custom_call.1} parent=55 // pred_check
          %p891 = pneg %p197
        $region58: #{tpu_custom_call.1} parent=55 // pred_check_branch
          %893 = sbr.rel (%p891) target = $region60
        $region59: #{tpu_custom_call.1} parent=55 // pred_region
          %s894 = sand.u32 %s182, 1
          %s895 = scalar_lea.sflag [#allocation3], %s894
          %s896 = sand.u32 %s182, 1
          %s897 = smul.addr %s896, 64
          %s898 = scalar_lea.vmem [#allocation2], %s897
          %899 = dma.done %s895, 1024
        $region60: #{tpu_custom_call.1} parent=55 // pred_fallthru
          _
      $region56: #{tpu_custom_call.1} parent=5 // pred_fallthru
        _
    $region6: #{tpu_custom_call.1} parent=1 // loop_footer
      %s20 = sadd.s32 1, %s16
    $region7: #{tpu_custom_call.1} parent=1 // loop_footer_branch
      %15 = sbr.rel target = $region3
    $region8: #{tpu_custom_call.1} parent=1 // loop_exit
      _
    %900 = vsyncpa [#allocation3], 1
    %s901 = scalar_lea.sflag [#allocation3], 1
    %902 = vsyncpa %s901, 1

</llo_original>
